<compile_context>
chip_gen: v7x
topology: tpu7x:2x2x1
jax: 0.10.0
libtpu: 0.0.40
codegen_flags: <defaults>
</compile_context>

<pallas_src>
import functools

import jax
import jax.numpy as jnp
from jax.experimental import pallas as pl
from jax.experimental.pallas import tpu as pltpu


def _mlp_kernel(x_ref, p1_ref, p2_ref, o_ref, *, d_in, d_hid):
    """Fused relu(x @ w1 + b1) @ w2 + b2 on one (tile_b, Din) block of x.

    p1_ref = concat([w1, b1]) : (Din+1, H)
    p2_ref = concat([w2, b2]) : (H+1, Dout)
    Slice boundaries (d_in=32, d_hid=64) are 8-sublane aligned -> free views.
    """
    w1 = p1_ref[:d_in, :]                 # (Din, H)
    b1 = p1_ref[d_in:d_in + 1, :]         # (1, H)   broadcast over batch
    w2 = p2_ref[:d_hid, :]                # (H, Dout)
    b2 = p2_ref[d_hid:d_hid + 1, :]       # (1, Dout)

    # First linear + bias + ReLU (MXU matmul with f32 accumulation, VPU rest).
    h = jnp.dot(x_ref[...], w1, preferred_element_type=jnp.float32)
    h = jnp.maximum(h + b1, 0.0)

    # Second linear + bias.
    y = jnp.dot(h.astype(w2.dtype), w2, preferred_element_type=jnp.float32)
    o_ref[...] = (y + b2).astype(o_ref.dtype)


def proto_model_forward(x, w1, b1, w2, b2, *, tile_b=256):
    """Fused MLP forward:  relu(x @ w1 + b1) @ w2 + b2.

    x : (B, Din)   w1 : (Din, H)   b1 : (1, H)
    w2 : (H, Dout) b2 : (1, Dout)  -> (B, Dout)

    Small B  -> single whole-array VMEM block, NO grid (no pipeline overhead).
    Large B  -> batch tiled over a "parallel" grid axis with the packed weight
                blocks resident in VMEM across every grid step.
    """
    B, d_in = x.shape
    d_hid, d_out = w2.shape

    # Pack params: 5 operands -> 2 (fewer, larger DMA descriptors).
    p1 = jnp.concatenate([w1, b1], axis=0)   # (Din+1, H)
    p2 = jnp.concatenate([w2, b2], axis=0)   # (H+1, Dout)

    kernel = functools.partial(_mlp_kernel, d_in=d_in, d_hid=d_hid)
    out_shape = jax.ShapeDtypeStruct((B, d_out), x.dtype)

    if B <= tile_b or B % tile_b != 0:
        # Single-block call: everything lives in VMEM, no grid machinery.
        return pl.pallas_call(
            kernel,
            out_shape=out_shape,
            in_specs=[pl.BlockSpec(memory_space=pltpu.MemorySpace.VMEM)] * 3,
            out_specs=pl.BlockSpec(memory_space=pltpu.MemorySpace.VMEM),
        )(x, p1, p2)

    # Batch-tiled path: weights stay resident (index_map -> (0,0) every step);
    # the batch axis is "parallel" so it shards across both TCs on v7x.
    return pl.pallas_call(
        kernel,
        out_shape=out_shape,
        grid=(B // tile_b,),
        in_specs=[
            pl.BlockSpec((tile_b, d_in), lambda i: (i, 0)),
            pl.BlockSpec(p1.shape, lambda i: (0, 0)),
            pl.BlockSpec(p2.shape, lambda i: (0, 0)),
        ],
        out_specs=pl.BlockSpec((tile_b, d_out), lambda i: (i, 0)),
        compiler_params=pltpu.CompilerParams(
            dimension_semantics=("parallel",)),
    )(x, p1, p2)


def init_params(key, d_in, d_hid, d_out, dtype=jnp.float32):
    """Deterministic PyTorch-style Linear init: U(-1/sqrt(fan_in), +1/sqrt(fan_in))."""
    k1, k2, k3, k4 = jax.random.split(key, 4)
    bound1 = 1.0 / jnp.sqrt(d_in)
    bound2 = 1.0 / jnp.sqrt(d_hid)
    w1 = jax.random.uniform(k1, (d_in, d_hid), dtype, -bound1, bound1)
    b1 = jax.random.uniform(k2, (1, d_hid), dtype, -bound1, bound1)
    w2 = jax.random.uniform(k3, (d_hid, d_out), dtype, -bound2, bound2)
    b2 = jax.random.uniform(k4, (1, d_out), dtype, -bound2, bound2)
    return w1, b1, w2, b2


def _reference(x, w1, b1, w2, b2):
    return jnp.maximum(x @ w1 + b1, 0.0) @ w2 + b2


if __name__ == "__main__":
    # TODO(synk): Proto_Model.forward delegates to a subclass-defined self.model;
    # a deterministic 2-layer MLP stands in for that model. save/load and the
    # parameter-listing helpers are host-side utilities with no kernel equivalent.
    d_in, d_hid, d_out = 32, 64, 32

    key = jax.random.PRNGKey(0)
    kx, kp, kx2 = jax.random.split(key, 3)
    w1, b1, w2, b2 = init_params(kp, d_in, d_hid, d_out)

    # --- Small-batch path (no grid, single VMEM block) -----------------------
    batch = 8
    x = jax.random.normal(kx, (batch, d_in), jnp.float32)
    out = jax.block_until_ready(proto_model_forward(x, w1, b1, w2, b2))
    ref = _reference(x, w1, b1, w2, b2)
    assert out.shape == (batch, d_out)
    assert jnp.allclose(out, ref, atol=1e-5, rtol=1e-5)

    # --- Large-batch path (batch tiled, weights resident, "parallel" axis) ---
    big_batch, tile_b = 512, 256
    x_big = jax.random.normal(kx2, (big_batch, d_in), jnp.float32)
    out_big = jax.block_until_ready(
        proto_model_forward(x_big, w1, b1, w2, b2, tile_b=tile_b))
    ref_big = _reference(x_big, w1, b1, w2, b2)
    assert out_big.shape == (big_batch, d_out)
    assert jnp.allclose(out_big, ref_big, atol=1e-5, rtol=1e-5)

    print("KERNEL_OK")
</pallas_src>

<mosaic_0001>
module attributes {stable_mosaic.version = 11 : i64} {
  func.func @_mlp_kernel(%arg0: memref<8x32xf32, #tpu.memory_space<vmem>>, %arg1: memref<33x64xf32, #tpu.memory_space<vmem>>, %arg2: memref<65x32xf32, #tpu.memory_space<vmem>>, %arg3: memref<8x32xf32, #tpu.memory_space<vmem>>) attributes {dimension_semantics = [], scalar_prefetch = 0 : i64, scratch_operands = 0 : i64, tpu.core_type = #tpu.core_type<tc>} {
    %c0 = arith.constant 0 : index
    %c0_0 = arith.constant 0 : index
    %0 = vector.load %arg1[%c0, %c0_0] : memref<33x64xf32, #tpu.memory_space<vmem>>, vector<32x64xf32>
    %c32 = arith.constant 32 : index
    %c0_1 = arith.constant 0 : index
    %1 = vector.load %arg1[%c32, %c0_1] : memref<33x64xf32, #tpu.memory_space<vmem>>, vector<1x64xf32>
    %c0_2 = arith.constant 0 : index
    %c0_3 = arith.constant 0 : index
    %2 = vector.load %arg2[%c0_2, %c0_3] : memref<65x32xf32, #tpu.memory_space<vmem>>, vector<64x32xf32>
    %c64 = arith.constant 64 : index
    %c0_4 = arith.constant 0 : index
    %3 = vector.load %arg2[%c64, %c0_4] : memref<65x32xf32, #tpu.memory_space<vmem>>, vector<1x32xf32>
    %c0_5 = arith.constant 0 : index
    %c0_6 = arith.constant 0 : index
    %4 = vector.load %arg0[%c0_5, %c0_6] : memref<8x32xf32, #tpu.memory_space<vmem>>, vector<8x32xf32>
    %cst = arith.constant dense<0.000000e+00> : vector<8x64xf32>
    %5 = tpu.matmul %4, %0, %cst {dimension_numbers = #tpu.dot_dimension_numbers<[1], [0], [0], [1], [0, 0, 1, 1], [], []>} : vector<8x32xf32>, vector<32x64xf32>, vector<8x64xf32> -> vector<8x64xf32>
    %6 = vector.broadcast %1 : vector<1x64xf32> to vector<8x64xf32>
    %7 = arith.addf %5, %6 : vector<8x64xf32>
    %cst_7 = arith.constant 0.000000e+00 : f32
    %8 = vector.broadcast %cst_7 : f32 to vector<8x64xf32>
    %9 = arith.maximumf %7, %8 : vector<8x64xf32>
    %cst_8 = arith.constant dense<0.000000e+00> : vector<8x32xf32>
    %10 = tpu.matmul %9, %2, %cst_8 {dimension_numbers = #tpu.dot_dimension_numbers<[1], [0], [0], [1], [0, 0, 1, 1], [], []>} : vector<8x64xf32>, vector<64x32xf32>, vector<8x32xf32> -> vector<8x32xf32>
    %11 = vector.broadcast %3 : vector<1x32xf32> to vector<8x32xf32>
    %12 = arith.addf %10, %11 : vector<8x32xf32>
    %c0_9 = arith.constant 0 : index
    %c0_10 = arith.constant 0 : index
    %13 = vector.load %arg3[%c0_9, %c0_10] : memref<8x32xf32, #tpu.memory_space<vmem>>, vector<8x32xf32>
    tpu.vector_store %arg3[%c0_9, %c0_10], %12 {strides = array<i32>} : memref<8x32xf32, #tpu.memory_space<vmem>>, vector<8x32xf32>,
    return
  }
}

</mosaic_0001>

<llo_original>
// kernel: tpu_custom_call.1
$region0: #{tpu_custom_call.1}
  #allocation0 [shape = 'u32[]', space=smem, size = 0x4, offset = 0x4, fixed_abs, tag = 'smem constant byte address 0x4 - core index']
  #allocation1 [shape = 'u32[144,128]{1,0:T(1,128)}', space=vmem, size = 0x12000, scoped, tag = 'internal scratch']
  %s0 = inlined_call_operand.vmem [shape: f32[8,32], index: 0, kind: input, shape index: {}]
  %s1 = inlined_call_operand.vmem [shape: f32[33,64], index: 1, kind: input, shape index: {}]
  %s2 = inlined_call_operand.vmem [shape: f32[65,32], index: 2, kind: input, shape index: {}]
  %s3 = inlined_call_operand.hbm [shape: f32[8,32], index: 3, kind: output, shape index: {}]
  %s4 = sld [smem:[#allocation0]]
  $region22: #{tpu_custom_call.1} parent=0
    _
  %s6 = ssub.s32 1, %s4
  %s7 = scalar_select 0, %s6, %s4
  $region1: #{tpu_custom_call.1} parent=0
    #allocation2 [shape = 'u8[4096]{0}', space=vmem, size = 0x1000, scoped, tag = 'output window, operand 0, single buffered']
    #allocation3 [shape = 's32[1]{0}', space=sflag, size = 0x4, scoped, tag = 'scoped memory for tpu_custom_call.1']
    %8 = vsyncpa [#allocation3], 0
    // Predicated region
    $region2: #{tpu_custom_call.1} parent=1 // pred_check
      _
    $region3: #{tpu_custom_call.1} parent=1 // pred_check_branch
      %10 = sbr.rel (0) target = $region5
    $region4: #{tpu_custom_call.1} parent=1 // pred_region
      _
    $region5: #{tpu_custom_call.1} parent=1 // pred_fallthru
      _
    // Predicated region
    $region6: #{tpu_custom_call.1} parent=1 // pred_check
      _
    $region7: #{tpu_custom_call.1} parent=1 // pred_check_branch
      %12 = sbr.rel (0) target = $region9
    $region8: #{tpu_custom_call.1} parent=1 // pred_region
      _
    $region9: #{tpu_custom_call.1} parent=1 // pred_fallthru
      _
    // Predicated region
    $region10: #{tpu_custom_call.1} parent=1 // pred_check
      _
    $region11: #{tpu_custom_call.1} parent=1 // pred_check_branch
      %14 = sbr.rel (0) target = $region13
    $region12: #{tpu_custom_call.1} parent=1 // pred_region
      _
    $region13: #{tpu_custom_call.1} parent=1 // pred_fallthru
      _
    %v15 = vld [vmem:[%s1] sm:$0xff]
    %v16 = vld [vmem:[%s1 + $0x8] sm:$0xff]
    %v17 = vld [vmem:[%s1 + $0x10] sm:$0xff]
    %v18 = vld [vmem:[%s1 + $0x18] sm:$0xff]
    %v19 = vld [vmem:[%s1 + $0x20] sm:$0x1]
    %v20 = vld [vmem:[%s2] sm:$0xff]
    %v21 = vld [vmem:[%s2 + $0x8] sm:$0xff]
    %v22 = vld [vmem:[%s2 + $0x10] sm:$0xff]
    %v23 = vld [vmem:[%s2 + $0x18] sm:$0xff]
    %v24 = vld [vmem:[%s2 + $0x20] sm:$0xff]
    %v25 = vld [vmem:[%s2 + $0x28] sm:$0xff]
    %v26 = vld [vmem:[%s2 + $0x30] sm:$0xff]
    %v27 = vld [vmem:[%s2 + $0x38] sm:$0xff]
    %v28 = vld [vmem:[%s2 + $0x40] sm:$0x1]
    %v29 = vld [vmem:[%s0] sm:$0xff]
    %v30 = vlaneseq
    %v31 = vshrl.u32 %v30, 7
    %v32 = vsub.s32 0, %v31
    %v33 = vrot.slane %v19, %v32
    %vm34 = vcmask 261120
    %v36 = vsel %vm34, %v29, 0
    %38 = vmatprep.subr.mxu0 0.0
    %39 = vmatpush1.msra.mxu0 %v15
    %40 = vmatprep.subr.mxu0 0.0
    %41 = vmatpush1.msra.mxu0 %v16
    %42 = vmatprep.subr.mxu0 0.0
    %43 = vmatpush1.msra.mxu0 %v17
    %44 = vmatprep.subr.mxu0 0.0
    %45 = vmatpush1.msra.mxu0 %v18
    %46 = vmatprep.subr.mxu0 0.0
    %47 = vmatpush1.msra.mxu0 0.0
    %48 = vmatprep.subr.mxu0 0.0
    %49 = vmatpush1.msra.mxu0 0.0
    %50 = vmatprep.subr.mxu0 0.0
    %51 = vmatpush1.msra.mxu0 0.0
    %52 = vmatprep.subr.mxu0 0.0
    %53 = vmatpush1.msra.mxu0 0.0
    %54 = vmatprep.subr.mxu0 0.0
    %55 = vmatpush1.msra.mxu0 0.0
    %56 = vmatprep.subr.mxu0 0.0
    %57 = vmatpush1.msra.mxu0 0.0
    %58 = vmatprep.subr.mxu0 0.0
    %59 = vmatpush1.msra.mxu0 0.0
    %60 = vmatprep.subr.mxu0 0.0
    %61 = vmatpush1.msra.mxu0 0.0
    %62 = vmatprep.subr.mxu0 0.0
    %63 = vmatpush1.msra.mxu0 0.0
    %64 = vmatprep.subr.mxu0 0.0
    %65 = vmatpush1.msra.mxu0 0.0
    %66 = vmatprep.subr.mxu0 0.0
    %67 = vmatpush1.msra.mxu0 0.0
    %68 = vmatprep.subr.mxu0 0.0
    %69 = vmatpush1.msra.mxu0 0.0
    %70 = vmatprep.subr.mxu0 0.0
    %71 = vmatpush1.msra.mxu0 0.0
    %72 = vmatprep.subr.mxu0 0.0
    %73 = vmatpush1.msra.mxu0 0.0
    %74 = vmatprep.subr.mxu0 0.0
    %75 = vmatpush1.msra.mxu0 0.0
    %76 = vmatprep.subr.mxu0 0.0
    %77 = vmatpush1.msra.mxu0 0.0
    %78 = vmatprep.subr.mxu0 0.0
    %79 = vmatpush1.msra.mxu0 0.0
    %80 = vmatprep.subr.mxu0 0.0
    %81 = vmatpush1.msra.mxu0 0.0
    %82 = vmatprep.subr.mxu0 0.0
    %83 = vmatpush1.msra.mxu0 0.0
    %84 = vmatprep.subr.mxu0 0.0
    %85 = vmatpush1.msra.mxu0 0.0
    %86 = vmatprep.subr.mxu0 0.0
    %87 = vmatpush1.msra.mxu0 0.0
    %88 = vmatprep.subr.mxu0 0.0
    %89 = vmatpush1.msra.mxu0 0.0
    %90 = vmatprep.subr.mxu0 0.0
    %91 = vmatpush1.msra.mxu0 0.0
    %92 = vmatprep.subr.mxu0 0.0
    %93 = vmatpush1.msra.mxu0 0.0
    %94 = vmatprep.subr.mxu0 0.0
    %95 = vmatpush1.msra.mxu0 0.0
    %96 = vmatprep.subr.mxu0 0.0
    %97 = vmatpush1.msra.mxu0 0.0
    %98 = vmatprep.subr.mxu0 0.0
    %99 = vmatpush1.msra.mxu0 0.0
    %100 = vmatprep.subr.mxu0 0.0
    %101 = vmatpush1.msra.mxu0 0.0
    %102 = vmatprep.mubr.f32.mxu0 0.0
    %103 = vmatmul.mubr.f32.gmra.mrb[0].mxu0 %v36
    %v104 = vpop.f32.mrb[0].mxu0
    %v105 = vadd.f32 %v33, %v104
    %v106 = vpop.f32.mrb[0].mxu0
    %107 = vdwg.mxu0
    %v108 = vmax.f32 %v105, 0.0
    %v109 = vlaneseq
    %v110 = vshrl.u32 %v109, 7
    %v111 = vsub.s32 0, %v110
    %v112 = vrot.slane %v28, %v111
    %vm113 = vcmask 523264
    %v115 = vsel %vm113, %v108, 0
    %117 = vmatprep.subr.mxu0 0.0
    %118 = vmatpush1.msra.mxu0 %v20
    %119 = vmatprep.subr.mxu0 0.0
    %120 = vmatpush1.msra.mxu0 %v21
    %121 = vmatprep.subr.mxu0 0.0
    %122 = vmatpush1.msra.mxu0 %v22
    %123 = vmatprep.subr.mxu0 0.0
    %124 = vmatpush1.msra.mxu0 %v23
    %125 = vmatprep.subr.mxu0 0.0
    %126 = vmatpush1.msra.mxu0 %v24
    %127 = vmatprep.subr.mxu0 0.0
    %128 = vmatpush1.msra.mxu0 %v25
    %129 = vmatprep.subr.mxu0 0.0
    %130 = vmatpush1.msra.mxu0 %v26
    %131 = vmatprep.subr.mxu0 0.0
    %132 = vmatpush1.msra.mxu0 %v27
    %133 = vmatprep.subr.mxu0 0.0
    %134 = vmatpush1.msra.mxu0 0.0
    %135 = vmatprep.subr.mxu0 0.0
    %136 = vmatpush1.msra.mxu0 0.0
    %137 = vmatprep.subr.mxu0 0.0
    %138 = vmatpush1.msra.mxu0 0.0
    %139 = vmatprep.subr.mxu0 0.0
    %140 = vmatpush1.msra.mxu0 0.0
    %141 = vmatprep.subr.mxu0 0.0
    %142 = vmatpush1.msra.mxu0 0.0
    %143 = vmatprep.subr.mxu0 0.0
    %144 = vmatpush1.msra.mxu0 0.0
    %145 = vmatprep.subr.mxu0 0.0
    %146 = vmatpush1.msra.mxu0 0.0
    %147 = vmatprep.subr.mxu0 0.0
    %148 = vmatpush1.msra.mxu0 0.0
    %149 = vmatprep.subr.mxu0 0.0
    %150 = vmatpush1.msra.mxu0 0.0
    %151 = vmatprep.subr.mxu0 0.0
    %152 = vmatpush1.msra.mxu0 0.0
    %153 = vmatprep.subr.mxu0 0.0
    %154 = vmatpush1.msra.mxu0 0.0
    %155 = vmatprep.subr.mxu0 0.0
    %156 = vmatpush1.msra.mxu0 0.0
    %157 = vmatprep.subr.mxu0 0.0
    %158 = vmatpush1.msra.mxu0 0.0
    %159 = vmatprep.subr.mxu0 0.0
    %160 = vmatpush1.msra.mxu0 0.0
    %161 = vmatprep.subr.mxu0 0.0
    %162 = vmatpush1.msra.mxu0 0.0
    %163 = vmatprep.subr.mxu0 0.0
    %164 = vmatpush1.msra.mxu0 0.0
    %165 = vmatprep.subr.mxu0 0.0
    %166 = vmatpush1.msra.mxu0 0.0
    %167 = vmatprep.subr.mxu0 0.0
    %168 = vmatpush1.msra.mxu0 0.0
    %169 = vmatprep.subr.mxu0 0.0
    %170 = vmatpush1.msra.mxu0 0.0
    %171 = vmatprep.subr.mxu0 0.0
    %172 = vmatpush1.msra.mxu0 0.0
    %173 = vmatprep.subr.mxu0 0.0
    %174 = vmatpush1.msra.mxu0 0.0
    %175 = vmatprep.subr.mxu0 0.0
    %176 = vmatpush1.msra.mxu0 0.0
    %177 = vmatprep.subr.mxu0 0.0
    %178 = vmatpush1.msra.mxu0 0.0
    %179 = vmatprep.subr.mxu0 0.0
    %180 = vmatpush1.msra.mxu0 0.0
    %181 = vmatprep.mubr.f32.mxu0 0.0
    %182 = vmatmul.mubr.f32.gmra.mrb[0].mxu0 %v115
    %v183 = vpop.f32.mrb[0].mxu0
    %v184 = vadd.f32 %v112, %v183
    %v185 = vpop.f32.mrb[0].mxu0
    %186 = vdwg.mxu0
    %187 = vst.msk [vmem:[#allocation2] sm:$0xff] %vm34, %v184
    // Predicated region
    $region14: #{tpu_custom_call.1} parent=1 // pred_check
      _
    $region15: #{tpu_custom_call.1} parent=1 // pred_check_branch
      %189 = sbr.rel (0) target = $region17
    $region16: #{tpu_custom_call.1} parent=1 // pred_region
      %s191 = ssub.s32 128, 128
      %192 = vsyncadd [#allocation3], %s191
      %s194 = sshll.u32 [#allocation2], 4
      %s195 = int_to_ptr.vmem [resolvable:$true] %s194
      %197 = dma.vmem_to_hbm [thread:$0]  %s195, 128, %s3, [#allocation3]
    $region17: #{tpu_custom_call.1} parent=1 // pred_fallthru
      _
    // Predicated region
    $region18: #{tpu_custom_call.1} parent=1 // pred_check
      _
    $region19: #{tpu_custom_call.1} parent=1 // pred_check_branch
      %199 = sbr.rel (0) target = $region21
    $region20: #{tpu_custom_call.1} parent=1 // pred_region
      %200 = dma.done [#allocation3], 128
    $region21: #{tpu_custom_call.1} parent=1 // pred_fallthru
      _
    %201 = vsyncpa [#allocation3], 1

</llo_original>
